<compile_context>
chip_gen: v7x
topology: tpu7x:2x2x1
jax: 0.10.0
libtpu: 0.0.40
codegen_flags: <defaults>
</compile_context>

<pallas_src>
import functools

import jax
import jax.numpy as jnp
from jax import lax
from jax.experimental import pallas as pl
from jax.experimental.pallas import tpu as pltpu


def _critic_kernel(ob_ref, w1_ref, b1_ref, w2_ref, b2_ref, w3_ref, b3_ref,
                   out_ref):
    """Fused 3-layer MLP critic for one batch tile.

    ob_ref : (tile_b, size_ob) VMEM   batch tile (pipelined over the grid)
    w1_ref : (size_ob, H1)     VMEM   resident across grid steps
    b1_ref : (1, H1)           VMEM
    w2_ref : (H1, H2)          VMEM
    b2_ref : (1, H2)           VMEM
    w3_ref : (1, H2)           VMEM   value-head weight as a row
    b3_ref : (1, 1)            SMEM   value-head bias (scalar path)
    out_ref: (1, tile_b)       VMEM   lane-dense output row
    """
    x = ob_ref[...]  # f32 (the ob.float() cast is done once in the wrapper)

    # Layer 1: relu(ob @ W1 + b1)  -> (tile_b, H1)
    h1 = jnp.dot(x, w1_ref[...], preferred_element_type=jnp.float32)
    h1 = jnp.maximum(h1 + b1_ref[...], 0.0)

    # Layer 2: relu(h1 @ W2 + b2)  -> (tile_b, H2)
    h2 = jnp.dot(h1, w2_ref[...], preferred_element_type=jnp.float32)
    h2 = jnp.maximum(h2 + b2_ref[...], 0.0)

    # Value head: contract w3 (1, H2) against h2's feature axis (transposed-RHS
    # matmul, same pattern as q @ k.T in attention). The MXU emits the result
    # directly as a lane-dense (1, tile_b) row -> unmasked stores, no (tile_b, 1)
    # column and no relayout.
    out_row = lax.dot_general(
        w3_ref[...], h2,
        dimension_numbers=(((1,), (1,)), ((), ())),
        preferred_element_type=jnp.float32)           # (1, tile_b)

    out_ref[...] = out_row + b3_ref[0, 0]


def _round_up(x, m):
    return ((x + m - 1) // m) * m


@functools.partial(jax.jit, static_argnames=("tile_b",))
def ppo_critic_forward(ob, w1, b1, w2, b2, w3, b3, *, tile_b=1024):
    """Fused PPO critic forward.

    ob: (B, size_ob); w1: (size_ob, H1); b1: (1, H1); w2: (H1, H2); b2: (1, H2);
    w3: (H2, 1); b3: (1, 1).  Returns (B, 1) float32.
    """
    ob = ob.astype(jnp.float32)          # ob.float(); no-op if already f32.
    B, size_ob = ob.shape
    H1 = w1.shape[1]
    H2 = w2.shape[1]

    # Pick the batch tile: as large as requested, but aim for >= 2 grid steps
    # (v7x has 2 TensorCores) and keep it a multiple of 128 rows so the MXU's M
    # dimension and the lane-dense output row stay fully packed.
    tile = min(int(tile_b), _round_up(pl.cdiv(B, 2), 128))
    tile = max(tile, 128)
    num_tiles = pl.cdiv(B, tile)
    B_pad = num_tiles * tile
    if B_pad != B:
        ob = jnp.pad(ob, ((0, B_pad - B), (0, 0)))   # zero-pad tail tile

    w3_row = w3.reshape(1, H2)                       # (H2, 1) -> (1, H2), free
    b3_s = b3.reshape(1, 1).astype(jnp.float32)

    in_specs = [
        pl.BlockSpec((tile, size_ob), lambda i: (i, 0)),     # ob tile
        pl.BlockSpec((size_ob, H1), lambda i: (0, 0)),       # W1 (resident)
        pl.BlockSpec((1, H1), lambda i: (0, 0)),             # b1
        pl.BlockSpec((H1, H2), lambda i: (0, 0)),            # W2
        pl.BlockSpec((1, H2), lambda i: (0, 0)),             # b2
        pl.BlockSpec((1, H2), lambda i: (0, 0)),             # W3 row
        pl.BlockSpec(memory_space=pltpu.MemorySpace.SMEM),   # b3 scalar
    ]
    # Lane-dense output: one (1, tile) row per grid step; reshaped to (B, 1)
    # outside the kernel (contiguous -> free).
    out_specs = pl.BlockSpec((None, 1, tile), lambda i: (i, 0, 0))

    out = pl.pallas_call(
        _critic_kernel,
        out_shape=jax.ShapeDtypeStruct((num_tiles, 1, tile), jnp.float32),
        grid_spec=pltpu.PrefetchScalarGridSpec(
            num_scalar_prefetch=0,
            grid=(num_tiles,),
            in_specs=in_specs,
            out_specs=out_specs,
        ),
        compiler_params=pltpu.CompilerParams(
            dimension_semantics=("parallel",)),
    )(ob, w1, b1, w2, b2, w3_row, b3_s)

    return out.reshape(B_pad, 1)[:B]


def init_linear_params(key, fan_in, fan_out):
    """PyTorch-style Linear init: U(-1/sqrt(fan_in), 1/sqrt(fan_in)).

    Returns W as [fan_in, fan_out] (transposed for x @ W) and b as [1, fan_out].
    """
    kw, kb = jax.random.split(key)
    bound = 1.0 / jnp.sqrt(jnp.float32(fan_in))
    w = jax.random.uniform(kw, (fan_in, fan_out), jnp.float32, -bound, bound)
    b = jax.random.uniform(kb, (1, fan_out), jnp.float32, -bound, bound)
    return w, b


if __name__ == "__main__":
    # Observation vector -> hidden -> hidden -> scalar value.
    B = 512        # batch; splits into 2 tiles of 256 -> both v7x TensorCores
    SIZE_OB = 16   # size_ob
    H1 = 32        # hyperParams.HIDDEN_SIZE_1
    H2 = 32        # hyperParams.HIDDEN_SIZE_2

    key = jax.random.PRNGKey(0)
    k_ob, k1, k2, k3 = jax.random.split(key, 4)

    ob = jax.random.normal(k_ob, (B, SIZE_OB), jnp.float32)
    w1, b1 = init_linear_params(k1, SIZE_OB, H1)
    w2, b2 = init_linear_params(k2, H1, H2)
    w3, b3 = init_linear_params(k3, H2, 1)

    out = ppo_critic_forward(ob, w1, b1, w2, b2, w3, b3)
    out = jax.block_until_ready(out)

    # Pure-JAX reference check of the fused kernel.
    ref = jnp.maximum(ob @ w1 + b1, 0.0)
    ref = jnp.maximum(ref @ w2 + b2, 0.0)
    ref = ref @ w3 + b3
    assert out.shape == (B, 1)
    assert jnp.allclose(out, ref, atol=1e-4, rtol=1e-4), float(
        jnp.max(jnp.abs(out - ref)))

    print("KERNEL_OK")
</pallas_src>

<mosaic_0001>
module attributes {stable_mosaic.version = 11 : i64} {
  func.func @_critic_kernel(%arg0: i32, %arg1: memref<256x16xf32, #tpu.memory_space<vmem>>, %arg2: memref<16x32xf32, #tpu.memory_space<vmem>>, %arg3: memref<1x32xf32, #tpu.memory_space<vmem>>, %arg4: memref<32x32xf32, #tpu.memory_space<vmem>>, %arg5: memref<1x32xf32, #tpu.memory_space<vmem>>, %arg6: memref<1x32xf32, #tpu.memory_space<vmem>>, %arg7: memref<1x1xf32, #tpu.memory_space<smem>>, %arg8: memref<1x1x256xf32, #tpu.memory_space<vmem>>) attributes {dimension_semantics = [#tpu.dimension_semantics<parallel>], iteration_bounds = array<i64: 2>, scalar_prefetch = 0 : i64, scratch_operands = 0 : i64, tpu.core_type = #tpu.core_type<tc>, window_params = [{transform_indices = @transform_0, window_bounds = array<i64: 256, 16>}, {pipeline_mode = #tpu.pipeline_mode<synchronous>, transform_indices = @transform_1, window_bounds = array<i64: 16, 32>}, {pipeline_mode = #tpu.pipeline_mode<synchronous>, transform_indices = @transform_2, window_bounds = array<i64: 1, 32>}, {pipeline_mode = #tpu.pipeline_mode<synchronous>, transform_indices = @transform_3, window_bounds = array<i64: 32, 32>}, {pipeline_mode = #tpu.pipeline_mode<synchronous>, transform_indices = @transform_4, window_bounds = array<i64: 1, 32>}, {pipeline_mode = #tpu.pipeline_mode<synchronous>, transform_indices = @transform_5, window_bounds = array<i64: 1, 32>}, {transform_indices = @transform_6, window_bounds = array<i64: 1, 1>}, {transform_indices = @transform_7, window_bounds = array<i64: 1, 1, 256>}]} {
    %c0 = arith.constant 0 : index
    %c0_0 = arith.constant 0 : index
    %0 = vector.load %arg1[%c0, %c0_0] : memref<256x16xf32, #tpu.memory_space<vmem>>, vector<256x16xf32>
    %c0_1 = arith.constant 0 : index
    %c0_2 = arith.constant 0 : index
    %1 = vector.load %arg2[%c0_1, %c0_2] : memref<16x32xf32, #tpu.memory_space<vmem>>, vector<16x32xf32>
    %cst = arith.constant dense<0.000000e+00> : vector<256x32xf32>
    %2 = tpu.matmul %0, %1, %cst {dimension_numbers = #tpu.dot_dimension_numbers<[1], [0], [0], [1], [0, 0, 1, 1], [], []>} : vector<256x16xf32>, vector<16x32xf32>, vector<256x32xf32> -> vector<256x32xf32>
    %c0_3 = arith.constant 0 : index
    %c0_4 = arith.constant 0 : index
    %3 = vector.load %arg3[%c0_3, %c0_4] : memref<1x32xf32, #tpu.memory_space<vmem>>, vector<1x32xf32>
    %4 = vector.broadcast %3 : vector<1x32xf32> to vector<256x32xf32>
    %5 = arith.addf %2, %4 : vector<256x32xf32>
    %cst_5 = arith.constant 0.000000e+00 : f32
    %6 = vector.broadcast %cst_5 : f32 to vector<256x32xf32>
    %7 = arith.maximumf %5, %6 : vector<256x32xf32>
    %c0_6 = arith.constant 0 : index
    %c0_7 = arith.constant 0 : index
    %8 = vector.load %arg4[%c0_6, %c0_7] : memref<32x32xf32, #tpu.memory_space<vmem>>, vector<32x32xf32>
    %cst_8 = arith.constant dense<0.000000e+00> : vector<256x32xf32>
    %9 = tpu.matmul %7, %8, %cst_8 {dimension_numbers = #tpu.dot_dimension_numbers<[1], [0], [0], [1], [0, 0, 1, 1], [], []>} : vector<256x32xf32>, vector<32x32xf32>, vector<256x32xf32> -> vector<256x32xf32>
    %c0_9 = arith.constant 0 : index
    %c0_10 = arith.constant 0 : index
    %10 = vector.load %arg5[%c0_9, %c0_10] : memref<1x32xf32, #tpu.memory_space<vmem>>, vector<1x32xf32>
    %11 = vector.broadcast %10 : vector<1x32xf32> to vector<256x32xf32>
    %12 = arith.addf %9, %11 : vector<256x32xf32>
    %cst_11 = arith.constant 0.000000e+00 : f32
    %13 = vector.broadcast %cst_11 : f32 to vector<256x32xf32>
    %14 = arith.maximumf %12, %13 : vector<256x32xf32>
    %c0_12 = arith.constant 0 : index
    %c0_13 = arith.constant 0 : index
    %15 = vector.load %arg6[%c0_12, %c0_13] : memref<1x32xf32, #tpu.memory_space<vmem>>, vector<1x32xf32>
    %cst_14 = arith.constant dense<0.000000e+00> : vector<1x256xf32>
    %16 = tpu.matmul %15, %14, %cst_14 {dimension_numbers = #tpu.dot_dimension_numbers<[1], [1], [0], [0], [0, 0, 1, 0], [], []>} : vector<1x32xf32>, vector<256x32xf32>, vector<1x256xf32> -> vector<1x256xf32>
    %c0_15 = arith.constant 0 : index
    %c0_16 = arith.constant 0 : index
    %17 = memref.load %arg7[%c0_15, %c0_16] : memref<1x1xf32, #tpu.memory_space<smem>>
    %18 = vector.broadcast %17 : f32 to vector<1x256xf32>
    %19 = arith.addf %16, %18 : vector<1x256xf32>
    %c0_17 = arith.constant 0 : index
    %c0_18 = arith.constant 0 : index
    %c0_19 = arith.constant 0 : index
    %20 = vector.load %arg8[%c0_17, %c0_18, %c0_19] : memref<1x1x256xf32, #tpu.memory_space<vmem>>, vector<1x1x256xf32>
    %21 = vector.shape_cast %20 : vector<1x1x256xf32> to vector<1x256xf32>
    %22 = vector.shape_cast %19 : vector<1x256xf32> to vector<1x1x256xf32>
    tpu.vector_store %arg8[%c0_17, %c0_18, %c0_19], %22 {strides = array<i32>} : memref<1x1x256xf32, #tpu.memory_space<vmem>>, vector<1x1x256xf32>,
    return
  }
  func.func @transform_0(%arg0: i32) -> (i32, i32) {
    %c0_i32 = arith.constant 0 : i32
    %c0_i32_0 = arith.constant 0 : i32
    return %arg0, %c0_i32 : i32, i32
  }
  func.func @transform_1(%arg0: i32) -> (i32, i32) {
    %c0_i32 = arith.constant 0 : i32
    %c0_i32_0 = arith.constant 0 : i32
    %c0_i32_1 = arith.constant 0 : i32
    return %c0_i32, %c0_i32_0 : i32, i32
  }
  func.func @transform_2(%arg0: i32) -> (i32, i32) {
    %c0_i32 = arith.constant 0 : i32
    %c0_i32_0 = arith.constant 0 : i32
    %c0_i32_1 = arith.constant 0 : i32
    return %c0_i32, %c0_i32_0 : i32, i32
  }
  func.func @transform_3(%arg0: i32) -> (i32, i32) {
    %c0_i32 = arith.constant 0 : i32
    %c0_i32_0 = arith.constant 0 : i32
    %c0_i32_1 = arith.constant 0 : i32
    return %c0_i32, %c0_i32_0 : i32, i32
  }
  func.func @transform_4(%arg0: i32) -> (i32, i32) {
    %c0_i32 = arith.constant 0 : i32
    %c0_i32_0 = arith.constant 0 : i32
    %c0_i32_1 = arith.constant 0 : i32
    return %c0_i32, %c0_i32_0 : i32, i32
  }
  func.func @transform_5(%arg0: i32) -> (i32, i32) {
    %c0_i32 = arith.constant 0 : i32
    %c0_i32_0 = arith.constant 0 : i32
    %c0_i32_1 = arith.constant 0 : i32
    return %c0_i32, %c0_i32_0 : i32, i32
  }
  func.func @transform_6(%arg0: i32) -> (i32, i32) {
    %c0_i32 = arith.constant 0 : i32
    %c0_i32_0 = arith.constant 0 : i32
    %c0_i32_1 = arith.constant 0 : i32
    return %c0_i32, %c0_i32_0 : i32, i32
  }
  func.func @transform_7(%arg0: i32) -> (i32, i32, i32) {
    %c0_i32 = arith.constant 0 : i32
    %c0_i32_0 = arith.constant 0 : i32
    %c0_i32_1 = arith.constant 0 : i32
    return %arg0, %c0_i32, %c0_i32_0 : i32, i32, i32
  }
}

</mosaic_0001>

<llo_original>
// kernel: ppo_critic_forward.1
$region0: #{ppo_critic_forward.1}
  #allocation0 [shape = 'u32[]', space=smem, size = 0x4, offset = 0x4, fixed_abs, tag = 'smem constant byte address 0x4 - core index']
  #allocation1 [shape = 'u32[144,128]{1,0:T(1,128)}', space=vmem, size = 0x12000, scoped, tag = 'internal scratch']
  #allocation2 [shape = 'f32[1,1]{1,0:T(1,128)S(6)}', space=smem, size = 0x200, scoped, tag = 'scoped memory for ppo_critic_forward.1']
  %s0 = inlined_call_operand.vmem [shape: f32[512,16], index: 0, kind: input, shape index: {}]
  %s1 = inlined_call_operand.vmem [shape: f32[16,32], index: 1, kind: input, shape index: {}]
  %s2 = inlined_call_operand.vmem [shape: f32[1,32], index: 2, kind: input, shape index: {}]
  %s3 = inlined_call_operand.vmem [shape: f32[32,32], index: 3, kind: input, shape index: {}]
  %s4 = inlined_call_operand.vmem [shape: f32[1,32], index: 4, kind: input, shape index: {}]
  %s5 = inlined_call_operand.vmem [shape: f32[1,32], index: 5, kind: input, shape index: {}]
  %s6 = inlined_call_operand.<no memory space> [shape: f32[1,1], index: 6, kind: input, shape index: {}]
  %s7 = inlined_call_operand.hbm [shape: f32[2,1,256], index: 7, kind: output, shape index: {}]
  %s8 = sld [smem:[#allocation0]]
  $region61: #{ppo_critic_forward.1} parent=0
    _
  %s10 = ssub.s32 1, %s8
  %s11 = scalar_select 0, %s10, %s8
  %12 = sst [smem:[#allocation2]] %s6
  $region1: #{ppo_critic_forward.1} parent=0
    #allocation3 [shape = 'u8[2048]{0}', space=vmem, size = 0x800, scoped, tag = 'output window, operand 0']
    #allocation4 [shape = 's32[2]{0}', space=sflag, size = 0x8, scoped, tag = 'scoped memory for ppo_critic_forward.1']
    %13 = vsyncpa [#allocation4], 0
    %s14 = scalar_lea.sflag [#allocation4], 1
    %15 = vsyncpa %s14, 0
    loop: start=0, step=1, limit=4
    $region2: #{ppo_critic_forward.1} parent=1 // loop_pre_header
      _
    $region3: #{ppo_critic_forward.1} parent=1 // loop_header
      %s17 = sphi 0, %s21
      %p18 = scmp.ge.s32.totalorder %s17, 4
      %s27 = sphi 0, %s29
      %s30 = sphi 0, %s27
      %s31 = sphi 0, %s30
      %s47 = sphi 0, %s31
      %s51 = sphi 0, %s51
      %s53 = sphi 0, %s51
      %s54 = sphi 0, %s53
      %s68 = sphi 0, %s54
      %s72 = sphi 0, %s72
      %s74 = sphi 0, %s72
      %s75 = sphi 0, %s74
      %s89 = sphi 0, %s75
      %s93 = sphi 0, %s93
      %s95 = sphi 0, %s93
      %s96 = sphi 0, %s95
      %s110 = sphi 0, %s96
      %s114 = sphi 0, %s114
      %s116 = sphi 0, %s114
      %s117 = sphi 0, %s116
      %s131 = sphi 0, %s117
      %s135 = sphi 0, %s135
      %s137 = sphi 0, %s135
      %s138 = sphi 0, %s137
      %s152 = sphi 0, %s138
      %s156 = sphi 0, %s156
      %s158 = sphi 0, %s156
      %s159 = sphi 0, %s158
      %s173 = sphi 0, %s159
      %s179 = sphi 0, %s181
      %s182 = sphi 0, %s179
      %s183 = sphi 0, %s182
      %s199 = sphi 0, %s183
    $region4: #{ppo_critic_forward.1} parent=1 // loop_header_branch
      %20 = sbr.rel (%p18) target = $region8
    $region5: #{ppo_critic_forward.1} parent=1 // loop_body
      %s22 = ssub.s32 %s17, 1
      %s23 = ssub.s32 %s17, 2
      %s24 = sadd.s32 %s17, 1
      %s25 = ssub.s32 %s17, %s24
      %p26 = scmp.eq.s32.totalorder %s25, 0
      %s28 = sadd.s32 %s27, 1
      %s29 = scalar_select %p26, %s27, %s28
      %p32 = pneg %p26
      %p33 = scmp.eq.s32.totalorder %s17, 1
      %p34 = por %p32, %p33
      %p35 = scmp.ne.s32.totalorder %s27, %s30
      %p36 = scmp.eq.s32.totalorder %s17, 0
      %p37 = por %p35, %p36
      %p38 = scmp.ne.s32.totalorder %s27, %s30
      %p39 = scmp.eq.s32.totalorder %s22, 1
      %p40 = por %p38, %p39
      %p41 = scmp.ne.s32.totalorder %s30, %s31
      %p42 = scmp.eq.s32.totalorder %s22, 0
      %p43 = por %p41, %p42
      %p44 = scmp.ne.s32.totalorder %s30, %s31
      %p45 = scmp.eq.s32.totalorder %s23, 1
      %p46 = por %p44, %p45
      %p48 = scmp.ne.s32.totalorder %s31, %s47
      %p49 = scmp.eq.s32.totalorder %s23, 0
      %p50 = por %p48, %p49
      %s52 = sadd.s32 %s51, 1
      %p55 = scmp.eq.s32.totalorder %s17, 1
      %p56 = scmp.ne.s32.totalorder %s51, %s53
      %p57 = scmp.eq.s32.totalorder %s17, 0
      %p58 = por %p56, %p57
      %p59 = scmp.ne.s32.totalorder %s51, %s53
      %p60 = scmp.eq.s32.totalorder %s22, 1
      %p61 = por %p59, %p60
      %p62 = scmp.ne.s32.totalorder %s53, %s54
      %p63 = scmp.eq.s32.totalorder %s22, 0
      %p64 = por %p62, %p63
      %p65 = scmp.ne.s32.totalorder %s53, %s54
      %p66 = scmp.eq.s32.totalorder %s23, 1
      %p67 = por %p65, %p66
      %p69 = scmp.ne.s32.totalorder %s54, %s68
      %p70 = scmp.eq.s32.totalorder %s23, 0
      %p71 = por %p69, %p70
      %s73 = sadd.s32 %s72, 1
      %p76 = scmp.eq.s32.totalorder %s17, 1
      %p77 = scmp.ne.s32.totalorder %s72, %s74
      %p78 = scmp.eq.s32.totalorder %s17, 0
      %p79 = por %p77, %p78
      %p80 = scmp.ne.s32.totalorder %s72, %s74
      %p81 = scmp.eq.s32.totalorder %s22, 1
      %p82 = por %p80, %p81
      %p83 = scmp.ne.s32.totalorder %s74, %s75
      %p84 = scmp.eq.s32.totalorder %s22, 0
      %p85 = por %p83, %p84
      %p86 = scmp.ne.s32.totalorder %s74, %s75
      %p87 = scmp.eq.s32.totalorder %s23, 1
      %p88 = por %p86, %p87
      %p90 = scmp.ne.s32.totalorder %s75, %s89
      %p91 = scmp.eq.s32.totalorder %s23, 0
      %p92 = por %p90, %p91
      %s94 = sadd.s32 %s93, 1
      %p97 = scmp.eq.s32.totalorder %s17, 1
      %p98 = scmp.ne.s32.totalorder %s93, %s95
      %p99 = scmp.eq.s32.totalorder %s17, 0
      %p100 = por %p98, %p99
      %p101 = scmp.ne.s32.totalorder %s93, %s95
      %p102 = scmp.eq.s32.totalorder %s22, 1
      %p103 = por %p101, %p102
      %p104 = scmp.ne.s32.totalorder %s95, %s96
      %p105 = scmp.eq.s32.totalorder %s22, 0
      %p106 = por %p104, %p105
      %p107 = scmp.ne.s32.totalorder %s95, %s96
      %p108 = scmp.eq.s32.totalorder %s23, 1
      %p109 = por %p107, %p108
      %p111 = scmp.ne.s32.totalorder %s96, %s110
      %p112 = scmp.eq.s32.totalorder %s23, 0
      %p113 = por %p111, %p112
      %s115 = sadd.s32 %s114, 1
      %p118 = scmp.eq.s32.totalorder %s17, 1
      %p119 = scmp.ne.s32.totalorder %s114, %s116
      %p120 = scmp.eq.s32.totalorder %s17, 0
      %p121 = por %p119, %p120
      %p122 = scmp.ne.s32.totalorder %s114, %s116
      %p123 = scmp.eq.s32.totalorder %s22, 1
      %p124 = por %p122, %p123
      %p125 = scmp.ne.s32.totalorder %s116, %s117
      %p126 = scmp.eq.s32.totalorder %s22, 0
      %p127 = por %p125, %p126
      %p128 = scmp.ne.s32.totalorder %s116, %s117
      %p129 = scmp.eq.s32.totalorder %s23, 1
      %p130 = por %p128, %p129
      %p132 = scmp.ne.s32.totalorder %s117, %s131
      %p133 = scmp.eq.s32.totalorder %s23, 0
      %p134 = por %p132, %p133
      %s136 = sadd.s32 %s135, 1
      %p139 = scmp.eq.s32.totalorder %s17, 1
      %p140 = scmp.ne.s32.totalorder %s135, %s137
      %p141 = scmp.eq.s32.totalorder %s17, 0
      %p142 = por %p140, %p141
      %p143 = scmp.ne.s32.totalorder %s135, %s137
      %p144 = scmp.eq.s32.totalorder %s22, 1
      %p145 = por %p143, %p144
      %p146 = scmp.ne.s32.totalorder %s137, %s138
      %p147 = scmp.eq.s32.totalorder %s22, 0
      %p148 = por %p146, %p147
      %p149 = scmp.ne.s32.totalorder %s137, %s138
      %p150 = scmp.eq.s32.totalorder %s23, 1
      %p151 = por %p149, %p150
      %p153 = scmp.ne.s32.totalorder %s138, %s152
      %p154 = scmp.eq.s32.totalorder %s23, 0
      %p155 = por %p153, %p154
      %s157 = sadd.s32 %s156, 1
      %p160 = scmp.eq.s32.totalorder %s17, 1
      %p161 = scmp.ne.s32.totalorder %s156, %s158
      %p162 = scmp.eq.s32.totalorder %s17, 0
      %p163 = por %p161, %p162
      %p164 = scmp.ne.s32.totalorder %s156, %s158
      %p165 = scmp.eq.s32.totalorder %s22, 1
      %p166 = por %p164, %p165
      %p167 = scmp.ne.s32.totalorder %s158, %s159
      %p168 = scmp.eq.s32.totalorder %s22, 0
      %p169 = por %p167, %p168
      %p170 = scmp.ne.s32.totalorder %s158, %s159
      %p171 = scmp.eq.s32.totalorder %s23, 1
      %p172 = por %p170, %p171
      %p174 = scmp.ne.s32.totalorder %s159, %s173
      %p175 = scmp.eq.s32.totalorder %s23, 0
      %p176 = por %p174, %p175
      %s177 = ssub.s32 %s17, %s24
      %p178 = scmp.eq.s32.totalorder %s177, 0
      %s180 = sadd.s32 %s179, 1
      %s181 = scalar_select %p178, %s179, %s180
      %p184 = pneg %p178
      %p185 = scmp.eq.s32.totalorder %s17, 1
      %p186 = por %p184, %p185
      %p187 = scmp.ne.s32.totalorder %s179, %s182
      %p188 = scmp.eq.s32.totalorder %s17, 0
      %p189 = por %p187, %p188
      %p190 = scmp.ne.s32.totalorder %s179, %s182
      %p191 = scmp.eq.s32.totalorder %s22, 1
      %p192 = por %p190, %p191
      %p193 = scmp.ne.s32.totalorder %s182, %s183
      %p194 = scmp.eq.s32.totalorder %s22, 0
      %p195 = por %p193, %p194
      %p196 = scmp.ne.s32.totalorder %s182, %s183
      %p197 = scmp.eq.s32.totalorder %s23, 1
      %p198 = por %p196, %p197
      %p200 = scmp.ne.s32.totalorder %s183, %s199
      %p201 = scmp.eq.s32.totalorder %s23, 0
      %p202 = por %p200, %p201
      %p203 = scmp.le.s32.totalorder 1, %s17
      %p204 = scmp.lt.s32.totalorder %s17, 3
      %p205 = pnand %p203, %p204
      %p206 = pneg %p205
      // Predicated region
      $region9: #{ppo_critic_forward.1} parent=5 // pred_check
        _
      $region10: #{ppo_critic_forward.1} parent=5 // pred_check_branch
        %208 = sbr.rel (%p205) target = $region12
      $region11: #{ppo_critic_forward.1} parent=5 // pred_region
        %s209 = ssub.s32 %s17, 1
        // Predicated region
        $region13: #{ppo_critic_forward.1} parent=11 // pred_check
          %p210 = pneg %p64
        $region14: #{ppo_critic_forward.1} parent=11 // pred_check_branch
          %212 = sbr.rel (%p210) target = $region16
        $region15: #{ppo_critic_forward.1} parent=11 // pred_region
          _
        $region16: #{ppo_critic_forward.1} parent=11 // pred_fallthru
          _
        // Predicated region
        $region17: #{ppo_critic_forward.1} parent=11 // pred_check
          %p213 = pneg %p85
        $region18: #{ppo_critic_forward.1} parent=11 // pred_check_branch
          %215 = sbr.rel (%p213) target = $region20
        $region19: #{ppo_critic_forward.1} parent=11 // pred_region
          _
        $region20: #{ppo_critic_forward.1} parent=11 // pred_fallthru
          _
        // Predicated region
        $region21: #{ppo_critic_forward.1} parent=11 // pred_check
          %p216 = pneg %p106
        $region22: #{ppo_critic_forward.1} parent=11 // pred_check_branch
          %218 = sbr.rel (%p216) target = $region24
        $region23: #{ppo_critic_forward.1} parent=11 // pred_region
          _
        $region24: #{ppo_critic_forward.1} parent=11 // pred_fallthru
          _
        // Predicated region
        $region25: #{ppo_critic_forward.1} parent=11 // pred_check
          %p219 = pneg %p127
        $region26: #{ppo_critic_forward.1} parent=11 // pred_check_branch
          %221 = sbr.rel (%p219) target = $region28
        $region27: #{ppo_critic_forward.1} parent=11 // pred_region
          _
        $region28: #{ppo_critic_forward.1} parent=11 // pred_fallthru
          _
        // Predicated region
        $region29: #{ppo_critic_forward.1} parent=11 // pred_check
          %p222 = pneg %p148
        $region30: #{ppo_critic_forward.1} parent=11 // pred_check_branch
          %224 = sbr.rel (%p222) target = $region32
        $region31: #{ppo_critic_forward.1} parent=11 // pred_region
          _
        $region32: #{ppo_critic_forward.1} parent=11 // pred_fallthru
          _
        // Predicated region
        $region33: #{ppo_critic_forward.1} parent=11 // pred_check
          %p225 = pneg %p169
        $region34: #{ppo_critic_forward.1} parent=11 // pred_check_branch
          %227 = sbr.rel (%p225) target = $region36
        $region35: #{ppo_critic_forward.1} parent=11 // pred_region
          _
        $region36: #{ppo_critic_forward.1} parent=11 // pred_fallthru
          _
      $region12: #{ppo_critic_forward.1} parent=5 // pred_fallthru
        _
      %p228 = scmp.lt.s32.totalorder %s17, 2
      // Predicated region
      $region37: #{ppo_critic_forward.1} parent=5 // pred_check
        %p229 = pneg %p228
      $region38: #{ppo_critic_forward.1} parent=5 // pred_check_branch
        %231 = sbr.rel (%p229) target = $region40
      $region39: #{ppo_critic_forward.1} parent=5 // pred_region
        // Predicated region
        $region41: #{ppo_critic_forward.1} parent=39 // pred_check
          %p232 = pneg %p37
        $region42: #{ppo_critic_forward.1} parent=39 // pred_check_branch
          %234 = sbr.rel (%p232) target = $region44
        $region43: #{ppo_critic_forward.1} parent=39 // pred_region
          %s235 = smul.u32 32, %s17
          %p236 = scmp.lt.s32.totalorder %s235, 63
          %s237 = scalar_select %p236, %s235, 63
          %s238 = smul.addr %s237, 8
          %s239 = scalar_lea.vmem %s0, %s238
          %s240 = smul.u32 32, %s17
        $region44: #{ppo_critic_forward.1} parent=39 // pred_fallthru
          _
      $region40: #{ppo_critic_forward.1} parent=5 // pred_fallthru
        _
      %p241 = scmp.le.s32.totalorder 1, %s17
      %p242 = scmp.lt.s32.totalorder %s17, 3
      %p243 = pnand %p241, %p242
      %p244 = pneg %p243
      // Predicated region
      $region45: #{ppo_critic_forward.1} parent=5 // pred_check
        _
      $region46: #{ppo_critic_forward.1} parent=5 // pred_check_branch
        %246 = sbr.rel (%p243) target = $region48
      $region47: #{ppo_critic_forward.1} parent=5 // pred_region
        %s247 = ssub.s32 %s17, 1
        %s248 = smul.u32 32, %s22
        %p249 = scmp.lt.s32.totalorder %s248, 63
        %s250 = scalar_select %p249, %s248, 63
        %s251 = smul.addr %s250, 8
        %s252 = scalar_lea.vmem %s0, %s251
        %p253 = pneg %p43
        %p254 = pneg %p40
        %p255 = pneg %p64
        %p256 = pneg %p61
        %p257 = pneg %p85
        %p258 = pneg %p82
        %p259 = pneg %p106
        %p260 = pneg %p103
        %p261 = pneg %p127
        %p262 = pneg %p124
        %p263 = pneg %p148
        %p264 = pneg %p145
        %p265 = pneg %p169
        %p266 = pneg %p166
        %p267 = pneg %p195
        %p268 = pneg %p192
        %s269 = sand.u32 %s182, 1
        %s270 = scalar_lea.sflag [#allocation4], %s269
        %s271 = sand.u32 %s182, 1
        %s272 = smul.addr %s271, 2
        %s273 = scalar_lea.vmem [#allocation3], %s272
        %s274 = smul.u32 32, %s22
        %p275 = scmp.lt.s32.totalorder %s274, 63
        %s276 = scalar_select %p275, %s274, 63
        %s277 = smul.addr %s276, 8
        %s278 = scalar_lea.vmem %s0, %s277
        %s279 = smul.u32 32, %s22
        %v280 = vld [vmem:[%s278] sm:$0xff]
        %v281 = vld [vmem:[%s278 + $0x8] sm:$0xff]
        %v282 = vld [vmem:[%s278 + $0x10] sm:$0xff]
        %v283 = vld [vmem:[%s278 + $0x18] sm:$0xff]
        %v284 = vld [vmem:[%s278 + $0x20] sm:$0xff]
        %v285 = vld [vmem:[%s278 + $0x28] sm:$0xff]
        %v286 = vld [vmem:[%s278 + $0x30] sm:$0xff]
        %v287 = vld [vmem:[%s278 + $0x38] sm:$0xff]
        %v288 = vld [vmem:[%s278 + $0x40] sm:$0xff]
        %v289 = vld [vmem:[%s278 + $0x48] sm:$0xff]
        %v290 = vld [vmem:[%s278 + $0x50] sm:$0xff]
        %v291 = vld [vmem:[%s278 + $0x58] sm:$0xff]
        %v292 = vld [vmem:[%s278 + $0x60] sm:$0xff]
        %v293 = vld [vmem:[%s278 + $0x68] sm:$0xff]
        %v294 = vld [vmem:[%s278 + $0x70] sm:$0xff]
        %v295 = vld [vmem:[%s278 + $0x78] sm:$0xff]
        %v296 = vld [vmem:[%s278 + $0x80] sm:$0xff]
        %v297 = vld [vmem:[%s278 + $0x88] sm:$0xff]
        %v298 = vld [vmem:[%s278 + $0x90] sm:$0xff]
        %v299 = vld [vmem:[%s278 + $0x98] sm:$0xff]
        %v300 = vld [vmem:[%s278 + $0xa0] sm:$0xff]
        %v301 = vld [vmem:[%s278 + $0xa8] sm:$0xff]
        %v302 = vld [vmem:[%s278 + $0xb0] sm:$0xff]
        %v303 = vld [vmem:[%s278 + $0xb8] sm:$0xff]
        %v304 = vld [vmem:[%s278 + $0xc0] sm:$0xff]
        %v305 = vld [vmem:[%s278 + $0xc8] sm:$0xff]
        %v306 = vld [vmem:[%s278 + $0xd0] sm:$0xff]
        %v307 = vld [vmem:[%s278 + $0xd8] sm:$0xff]
        %v308 = vld [vmem:[%s278 + $0xe0] sm:$0xff]
        %v309 = vld [vmem:[%s278 + $0xe8] sm:$0xff]
        %v310 = vld [vmem:[%s278 + $0xf0] sm:$0xff]
        %v311 = vld [vmem:[%s278 + $0xf8] sm:$0xff]
        %v312 = vld [vmem:[%s1] sm:$0xff]
        %v313 = vld [vmem:[%s1 + $0x8] sm:$0xff]
        %v314 = vld [vmem:[%s2] sm:$0x1]
        %v316 = vlaneseq
        %v317 = vshrl.u32 %v316, 7
        %v318 = vsub.s32 0, %v317
        %v319 = vrot.slane %v314, %v318
        %vm321 = vcmask 130048
        %v323 = vsel %vm321, %v280, 0
        %v326 = vsel %vm321, %v281, 0
        %v329 = vsel %vm321, %v282, 0
        %v332 = vsel %vm321, %v283, 0
        %v335 = vsel %vm321, %v284, 0
        %v338 = vsel %vm321, %v285, 0
        %v341 = vsel %vm321, %v286, 0
        %v344 = vsel %vm321, %v287, 0
        %v347 = vsel %vm321, %v288, 0
        %v350 = vsel %vm321, %v289, 0
        %v353 = vsel %vm321, %v290, 0
        %v356 = vsel %vm321, %v291, 0
        %v359 = vsel %vm321, %v292, 0
        %v362 = vsel %vm321, %v293, 0
        %v365 = vsel %vm321, %v294, 0
        %v368 = vsel %vm321, %v295, 0
        %v371 = vsel %vm321, %v296, 0
        %v374 = vsel %vm321, %v297, 0
        %v377 = vsel %vm321, %v298, 0
        %v380 = vsel %vm321, %v299, 0
        %v383 = vsel %vm321, %v300, 0
        %v386 = vsel %vm321, %v301, 0
        %v389 = vsel %vm321, %v302, 0
        %v392 = vsel %vm321, %v303, 0
        %v395 = vsel %vm321, %v304, 0
        %v398 = vsel %vm321, %v305, 0
        %v401 = vsel %vm321, %v306, 0
        %v404 = vsel %vm321, %v307, 0
        %v407 = vsel %vm321, %v308, 0
        %v410 = vsel %vm321, %v309, 0
        %v413 = vsel %vm321, %v310, 0
        %v416 = vsel %vm321, %v311, 0
        %418 = vmatprep.subr.mxu0 0.0
        %419 = vmatpush1.msra.mxu0 %v312
        %420 = vmatprep.subr.mxu0 0.0
        %421 = vmatpush1.msra.mxu0 %v313
        %422 = vmatprep.subr.mxu0 0.0
        %423 = vmatpush1.msra.mxu0 0.0
        %424 = vmatprep.subr.mxu0 0.0
        %425 = vmatpush1.msra.mxu0 0.0
        %426 = vmatprep.subr.mxu0 0.0
        %427 = vmatpush1.msra.mxu0 0.0
        %428 = vmatprep.subr.mxu0 0.0
        %429 = vmatpush1.msra.mxu0 0.0
        %430 = vmatprep.subr.mxu0 0.0
        %431 = vmatpush1.msra.mxu0 0.0
        %432 = vmatprep.subr.mxu0 0.0
        %433 = vmatpush1.msra.mxu0 0.0
        %434 = vmatprep.subr.mxu0 0.0
        %435 = vmatpush1.msra.mxu0 0.0
        %436 = vmatprep.subr.mxu0 0.0
        %437 = vmatpush1.msra.mxu0 0.0
        %438 = vmatprep.subr.mxu0 0.0
        %439 = vmatpush1.msra.mxu0 0.0
        %440 = vmatprep.subr.mxu0 0.0
        %441 = vmatpush1.msra.mxu0 0.0
        %442 = vmatprep.subr.mxu0 0.0
        %443 = vmatpush1.msra.mxu0 0.0
        %444 = vmatprep.subr.mxu0 0.0
        %445 = vmatpush1.msra.mxu0 0.0
        %446 = vmatprep.subr.mxu0 0.0
        %447 = vmatpush1.msra.mxu0 0.0
        %448 = vmatprep.subr.mxu0 0.0
        %449 = vmatpush1.msra.mxu0 0.0
        %450 = vmatprep.subr.mxu0 0.0
        %451 = vmatpush1.msra.mxu0 0.0
        %452 = vmatprep.subr.mxu0 0.0
        %453 = vmatpush1.msra.mxu0 0.0
        %454 = vmatprep.subr.mxu0 0.0
        %455 = vmatpush1.msra.mxu0 0.0
        %456 = vmatprep.subr.mxu0 0.0
        %457 = vmatpush1.msra.mxu0 0.0
        %458 = vmatprep.subr.mxu0 0.0
        %459 = vmatpush1.msra.mxu0 0.0
        %460 = vmatprep.subr.mxu0 0.0
        %461 = vmatpush1.msra.mxu0 0.0
        %462 = vmatprep.subr.mxu0 0.0
        %463 = vmatpush1.msra.mxu0 0.0
        %464 = vmatprep.subr.mxu0 0.0
        %465 = vmatpush1.msra.mxu0 0.0
        %466 = vmatprep.subr.mxu0 0.0
        %467 = vmatpush1.msra.mxu0 0.0
        %468 = vmatprep.subr.mxu0 0.0
        %469 = vmatpush1.msra.mxu0 0.0
        %470 = vmatprep.subr.mxu0 0.0
        %471 = vmatpush1.msra.mxu0 0.0
        %472 = vmatprep.subr.mxu0 0.0
        %473 = vmatpush1.msra.mxu0 0.0
        %474 = vmatprep.subr.mxu0 0.0
        %475 = vmatpush1.msra.mxu0 0.0
        %476 = vmatprep.subr.mxu0 0.0
        %477 = vmatpush1.msra.mxu0 0.0
        %478 = vmatprep.subr.mxu0 0.0
        %479 = vmatpush1.msra.mxu0 0.0
        %480 = vmatprep.subr.mxu0 0.0
        %481 = vmatpush1.msra.mxu0 0.0
        %482 = vmatprep.mubr.f32.mxu0 0.0
        %483 = vmatmul.mubr.f32.gmra.mrb[0].mxu0 %v323
        %v484 = vpop.f32.mrb[0].mxu0
        %v485 = vadd.f32 %v319, %v484
        %v486 = vpop.f32.mrb[0].mxu0
        %487 = vmatprep.mubr.f32.mxu0 0.0
        %488 = vmatmul.mubr.f32.gmra.mrb[0].mxu0 %v326
        %v489 = vpop.f32.mrb[0].mxu0
        %v490 = vadd.f32 %v319, %v489
        %v491 = vpop.f32.mrb[0].mxu0
        %492 = vmatprep.mubr.f32.mxu0 0.0
        %493 = vmatmul.mubr.f32.gmra.mrb[0].mxu0 %v329
        %v494 = vpop.f32.mrb[0].mxu0
        %v495 = vadd.f32 %v319, %v494
        %v496 = vpop.f32.mrb[0].mxu0
        %497 = vmatprep.mubr.f32.mxu0 0.0
        %498 = vmatmul.mubr.f32.gmra.mrb[0].mxu0 %v332
        %v499 = vpop.f32.mrb[0].mxu0
        %v500 = vadd.f32 %v319, %v499
        %v501 = vpop.f32.mrb[0].mxu0
        %502 = vmatprep.mubr.f32.mxu0 0.0
        %503 = vmatmul.mubr.f32.gmra.mrb[0].mxu0 %v335
        %v504 = vpop.f32.mrb[0].mxu0
        %v505 = vadd.f32 %v319, %v504
        %v506 = vpop.f32.mrb[0].mxu0
        %507 = vmatprep.mubr.f32.mxu0 0.0
        %508 = vmatmul.mubr.f32.gmra.mrb[0].mxu0 %v338
        %v509 = vpop.f32.mrb[0].mxu0
        %v510 = vadd.f32 %v319, %v509
        %v511 = vpop.f32.mrb[0].mxu0
        %512 = vmatprep.mubr.f32.mxu0 0.0
        %513 = vmatmul.mubr.f32.gmra.mrb[0].mxu0 %v341
        %v514 = vpop.f32.mrb[0].mxu0
        %v515 = vadd.f32 %v319, %v514
        %v516 = vpop.f32.mrb[0].mxu0
        %517 = vmatprep.mubr.f32.mxu0 0.0
        %518 = vmatmul.mubr.f32.gmra.mrb[0].mxu0 %v344
        %v519 = vpop.f32.mrb[0].mxu0
        %v520 = vadd.f32 %v319, %v519
        %v521 = vpop.f32.mrb[0].mxu0
        %522 = vmatprep.mubr.f32.mxu0 0.0
        %523 = vmatmul.mubr.f32.gmra.mrb[0].mxu0 %v347
        %v524 = vpop.f32.mrb[0].mxu0
        %v525 = vadd.f32 %v319, %v524
        %v526 = vpop.f32.mrb[0].mxu0
        %527 = vmatprep.mubr.f32.mxu0 0.0
        %528 = vmatmul.mubr.f32.gmra.mrb[0].mxu0 %v350
        %v529 = vpop.f32.mrb[0].mxu0
        %v530 = vadd.f32 %v319, %v529
        %v531 = vpop.f32.mrb[0].mxu0
        %532 = vmatprep.mubr.f32.mxu0 0.0
        %533 = vmatmul.mubr.f32.gmra.mrb[0].mxu0 %v353
        %v534 = vpop.f32.mrb[0].mxu0
        %v535 = vadd.f32 %v319, %v534
        %v536 = vpop.f32.mrb[0].mxu0
        %537 = vmatprep.mubr.f32.mxu0 0.0
        %538 = vmatmul.mubr.f32.gmra.mrb[0].mxu0 %v356
        %v539 = vpop.f32.mrb[0].mxu0
        %v540 = vadd.f32 %v319, %v539
        %v541 = vpop.f32.mrb[0].mxu0
        %542 = vmatprep.mubr.f32.mxu0 0.0
        %543 = vmatmul.mubr.f32.gmra.mrb[0].mxu0 %v359
        %v544 = vpop.f32.mrb[0].mxu0
        %v545 = vadd.f32 %v319, %v544
        %v546 = vpop.f32.mrb[0].mxu0
        %547 = vmatprep.mubr.f32.mxu0 0.0
        %548 = vmatmul.mubr.f32.gmra.mrb[0].mxu0 %v362
        %v549 = vpop.f32.mrb[0].mxu0
        %v550 = vadd.f32 %v319, %v549
        %v551 = vpop.f32.mrb[0].mxu0
        %552 = vmatprep.mubr.f32.mxu0 0.0
        %553 = vmatmul.mubr.f32.gmra.mrb[0].mxu0 %v365
        %v554 = vpop.f32.mrb[0].mxu0
        %v555 = vadd.f32 %v319, %v554
        %v556 = vpop.f32.mrb[0].mxu0
        %557 = vmatprep.mubr.f32.mxu0 0.0
        %558 = vmatmul.mubr.f32.gmra.mrb[0].mxu0 %v368
        %v559 = vpop.f32.mrb[0].mxu0
        %v560 = vadd.f32 %v319, %v559
        %v561 = vpop.f32.mrb[0].mxu0
        %562 = vmatprep.mubr.f32.mxu0 0.0
        %563 = vmatmul.mubr.f32.gmra.mrb[0].mxu0 %v371
        %v564 = vpop.f32.mrb[0].mxu0
        %v565 = vadd.f32 %v319, %v564
        %v566 = vpop.f32.mrb[0].mxu0
        %567 = vmatprep.mubr.f32.mxu0 0.0
        %568 = vmatmul.mubr.f32.gmra.mrb[0].mxu0 %v374
        %v569 = vpop.f32.mrb[0].mxu0
        %v570 = vadd.f32 %v319, %v569
        %v571 = vpop.f32.mrb[0].mxu0
        %572 = vmatprep.mubr.f32.mxu0 0.0
        %573 = vmatmul.mubr.f32.gmra.mrb[0].mxu0 %v377
        %v574 = vpop.f32.mrb[0].mxu0
        %v575 = vadd.f32 %v319, %v574
        %v576 = vpop.f32.mrb[0].mxu0
        %577 = vmatprep.mubr.f32.mxu0 0.0
        %578 = vmatmul.mubr.f32.gmra.mrb[0].mxu0 %v380
        %v579 = vpop.f32.mrb[0].mxu0
        %v580 = vadd.f32 %v319, %v579
        %v581 = vpop.f32.mrb[0].mxu0
        %582 = vmatprep.mubr.f32.mxu0 0.0
        %583 = vmatmul.mubr.f32.gmra.mrb[0].mxu0 %v383
        %v584 = vpop.f32.mrb[0].mxu0
        %v585 = vadd.f32 %v319, %v584
        %v586 = vpop.f32.mrb[0].mxu0
        %587 = vmatprep.mubr.f32.mxu0 0.0
        %588 = vmatmul.mubr.f32.gmra.mrb[0].mxu0 %v386
        %v589 = vpop.f32.mrb[0].mxu0
        %v590 = vadd.f32 %v319, %v589
        %v591 = vpop.f32.mrb[0].mxu0
        %592 = vmatprep.mubr.f32.mxu0 0.0
        %593 = vmatmul.mubr.f32.gmra.mrb[0].mxu0 %v389
        %v594 = vpop.f32.mrb[0].mxu0
        %v595 = vadd.f32 %v319, %v594
        %v596 = vpop.f32.mrb[0].mxu0
        %597 = vmatprep.mubr.f32.mxu0 0.0
        %598 = vmatmul.mubr.f32.gmra.mrb[0].mxu0 %v392
        %v599 = vpop.f32.mrb[0].mxu0
        %v600 = vadd.f32 %v319, %v599
        %v601 = vpop.f32.mrb[0].mxu0
        %602 = vmatprep.mubr.f32.mxu0 0.0
        %603 = vmatmul.mubr.f32.gmra.mrb[0].mxu0 %v395
        %v604 = vpop.f32.mrb[0].mxu0
        %v605 = vadd.f32 %v319, %v604
        %v606 = vpop.f32.mrb[0].mxu0
        %607 = vmatprep.mubr.f32.mxu0 0.0
        %608 = vmatmul.mubr.f32.gmra.mrb[0].mxu0 %v398
        %v609 = vpop.f32.mrb[0].mxu0
        %v610 = vadd.f32 %v319, %v609
        %v611 = vpop.f32.mrb[0].mxu0
        %612 = vmatprep.mubr.f32.mxu0 0.0
        %613 = vmatmul.mubr.f32.gmra.mrb[0].mxu0 %v401
        %v614 = vpop.f32.mrb[0].mxu0
        %v615 = vadd.f32 %v319, %v614
        %v616 = vpop.f32.mrb[0].mxu0
        %617 = vmatprep.mubr.f32.mxu0 0.0
        %618 = vmatmul.mubr.f32.gmra.mrb[0].mxu0 %v404
        %v619 = vpop.f32.mrb[0].mxu0
        %v620 = vadd.f32 %v319, %v619
        %v621 = vpop.f32.mrb[0].mxu0
        %622 = vmatprep.mubr.f32.mxu0 0.0
        %623 = vmatmul.mubr.f32.gmra.mrb[0].mxu0 %v407
        %v624 = vpop.f32.mrb[0].mxu0
        %v625 = vadd.f32 %v319, %v624
        %v626 = vpop.f32.mrb[0].mxu0
        %627 = vmatprep.mubr.f32.mxu0 0.0
        %628 = vmatmul.mubr.f32.gmra.mrb[0].mxu0 %v410
        %v629 = vpop.f32.mrb[0].mxu0
        %v630 = vadd.f32 %v319, %v629
        %v631 = vpop.f32.mrb[0].mxu0
        %632 = vmatprep.mubr.f32.mxu0 0.0
        %633 = vmatmul.mubr.f32.gmra.mrb[0].mxu0 %v413
        %v634 = vpop.f32.mrb[0].mxu0
        %v635 = vadd.f32 %v319, %v634
        %v636 = vpop.f32.mrb[0].mxu0
        %637 = vmatprep.mubr.f32.mxu0 0.0
        %638 = vmatmul.mubr.f32.gmra.mrb[0].mxu0 %v416
        %v639 = vpop.f32.mrb[0].mxu0
        %v640 = vadd.f32 %v319, %v639
        %v641 = vpop.f32.mrb[0].mxu0
        %642 = vdwg.mxu0
        %v643 = vmax.f32 %v485, 0.0
        %v644 = vmax.f32 %v490, 0.0
        %v645 = vmax.f32 %v495, 0.0
        %v646 = vmax.f32 %v500, 0.0
        %v647 = vmax.f32 %v505, 0.0
        %v648 = vmax.f32 %v510, 0.0
        %v649 = vmax.f32 %v515, 0.0
        %v650 = vmax.f32 %v520, 0.0
        %v651 = vmax.f32 %v525, 0.0
        %v652 = vmax.f32 %v530, 0.0
        %v653 = vmax.f32 %v535, 0.0
        %v654 = vmax.f32 %v540, 0.0
        %v655 = vmax.f32 %v545, 0.0
        %v656 = vmax.f32 %v550, 0.0
        %v657 = vmax.f32 %v555, 0.0
        %v658 = vmax.f32 %v560, 0.0
        %v659 = vmax.f32 %v565, 0.0
        %v660 = vmax.f32 %v570, 0.0
        %v661 = vmax.f32 %v575, 0.0
        %v662 = vmax.f32 %v580, 0.0
        %v663 = vmax.f32 %v585, 0.0
        %v664 = vmax.f32 %v590, 0.0
        %v665 = vmax.f32 %v595, 0.0
        %v666 = vmax.f32 %v600, 0.0
        %v667 = vmax.f32 %v605, 0.0
        %v668 = vmax.f32 %v610, 0.0
        %v669 = vmax.f32 %v615, 0.0
        %v670 = vmax.f32 %v620, 0.0
        %v671 = vmax.f32 %v625, 0.0
        %v672 = vmax.f32 %v630, 0.0
        %v673 = vmax.f32 %v635, 0.0
        %v674 = vmax.f32 %v640, 0.0
        %v675 = vld [vmem:[%s3] sm:$0xff]
        %v676 = vld [vmem:[%s3 + $0x8] sm:$0xff]
        %v677 = vld [vmem:[%s3 + $0x10] sm:$0xff]
        %v678 = vld [vmem:[%s3 + $0x18] sm:$0xff]
        %v679 = vld [vmem:[%s4] sm:$0x1]
        %v681 = vlaneseq
        %v682 = vshrl.u32 %v681, 7
        %v683 = vsub.s32 0, %v682
        %v684 = vrot.slane %v679, %v683
        %vm686 = vcmask 261120
        %v688 = vsel %vm686, %v643, 0
        %v691 = vsel %vm686, %v644, 0
        %v694 = vsel %vm686, %v645, 0
        %v697 = vsel %vm686, %v646, 0
        %v700 = vsel %vm686, %v647, 0
        %v703 = vsel %vm686, %v648, 0
        %v706 = vsel %vm686, %v649, 0
        %v709 = vsel %vm686, %v650, 0
        %v712 = vsel %vm686, %v651, 0
        %v715 = vsel %vm686, %v652, 0
        %v718 = vsel %vm686, %v653, 0
        %v721 = vsel %vm686, %v654, 0
        %v724 = vsel %vm686, %v655, 0
        %v727 = vsel %vm686, %v656, 0
        %v730 = vsel %vm686, %v657, 0
        %v733 = vsel %vm686, %v658, 0
        %v736 = vsel %vm686, %v659, 0
        %v739 = vsel %vm686, %v660, 0
        %v742 = vsel %vm686, %v661, 0
        %v745 = vsel %vm686, %v662, 0
        %v748 = vsel %vm686, %v663, 0
        %v751 = vsel %vm686, %v664, 0
        %v754 = vsel %vm686, %v665, 0
        %v757 = vsel %vm686, %v666, 0
        %v760 = vsel %vm686, %v667, 0
        %v763 = vsel %vm686, %v668, 0
        %v766 = vsel %vm686, %v669, 0
        %v769 = vsel %vm686, %v670, 0
        %v772 = vsel %vm686, %v671, 0
        %v775 = vsel %vm686, %v672, 0
        %v778 = vsel %vm686, %v673, 0
        %v781 = vsel %vm686, %v674, 0
        %783 = vmatprep.subr.mxu0 0.0
        %784 = vmatpush1.msra.mxu0 %v675
        %785 = vmatprep.subr.mxu0 0.0
        %786 = vmatpush1.msra.mxu0 %v676
        %787 = vmatprep.subr.mxu0 0.0
        %788 = vmatpush1.msra.mxu0 %v677
        %789 = vmatprep.subr.mxu0 0.0
        %790 = vmatpush1.msra.mxu0 %v678
        %791 = vmatprep.subr.mxu0 0.0
        %792 = vmatpush1.msra.mxu0 0.0
        %793 = vmatprep.subr.mxu0 0.0
        %794 = vmatpush1.msra.mxu0 0.0
        %795 = vmatprep.subr.mxu0 0.0
        %796 = vmatpush1.msra.mxu0 0.0
        %797 = vmatprep.subr.mxu0 0.0
        %798 = vmatpush1.msra.mxu0 0.0
        %799 = vmatprep.subr.mxu0 0.0
        %800 = vmatpush1.msra.mxu0 0.0
        %801 = vmatprep.subr.mxu0 0.0
        %802 = vmatpush1.msra.mxu0 0.0
        %803 = vmatprep.subr.mxu0 0.0
        %804 = vmatpush1.msra.mxu0 0.0
        %805 = vmatprep.subr.mxu0 0.0
        %806 = vmatpush1.msra.mxu0 0.0
        %807 = vmatprep.subr.mxu0 0.0
        %808 = vmatpush1.msra.mxu0 0.0
        %809 = vmatprep.subr.mxu0 0.0
        %810 = vmatpush1.msra.mxu0 0.0
        %811 = vmatprep.subr.mxu0 0.0
        %812 = vmatpush1.msra.mxu0 0.0
        %813 = vmatprep.subr.mxu0 0.0
        %814 = vmatpush1.msra.mxu0 0.0
        %815 = vmatprep.subr.mxu0 0.0
        %816 = vmatpush1.msra.mxu0 0.0
        %817 = vmatprep.subr.mxu0 0.0
        %818 = vmatpush1.msra.mxu0 0.0
        %819 = vmatprep.subr.mxu0 0.0
        %820 = vmatpush1.msra.mxu0 0.0
        %821 = vmatprep.subr.mxu0 0.0
        %822 = vmatpush1.msra.mxu0 0.0
        %823 = vmatprep.subr.mxu0 0.0
        %824 = vmatpush1.msra.mxu0 0.0
        %825 = vmatprep.subr.mxu0 0.0
        %826 = vmatpush1.msra.mxu0 0.0
        %827 = vmatprep.subr.mxu0 0.0
        %828 = vmatpush1.msra.mxu0 0.0
        %829 = vmatprep.subr.mxu0 0.0
        %830 = vmatpush1.msra.mxu0 0.0
        %831 = vmatprep.subr.mxu0 0.0
        %832 = vmatpush1.msra.mxu0 0.0
        %833 = vmatprep.subr.mxu0 0.0
        %834 = vmatpush1.msra.mxu0 0.0
        %835 = vmatprep.subr.mxu0 0.0
        %836 = vmatpush1.msra.mxu0 0.0
        %837 = vmatprep.subr.mxu0 0.0
        %838 = vmatpush1.msra.mxu0 0.0
        %839 = vmatprep.subr.mxu0 0.0
        %840 = vmatpush1.msra.mxu0 0.0
        %841 = vmatprep.subr.mxu0 0.0
        %842 = vmatpush1.msra.mxu0 0.0
        %843 = vmatprep.subr.mxu0 0.0
        %844 = vmatpush1.msra.mxu0 0.0
        %845 = vmatprep.subr.mxu0 0.0
        %846 = vmatpush1.msra.mxu0 0.0
        %847 = vmatprep.mubr.f32.mxu0 0.0
        %848 = vmatmul.mubr.f32.gmra.mrb[0].mxu0 %v688
        %v849 = vpop.f32.mrb[0].mxu0
        %v850 = vadd.f32 %v684, %v849
        %v851 = vpop.f32.mrb[0].mxu0
        %852 = vmatprep.mubr.f32.mxu0 0.0
        %853 = vmatmul.mubr.f32.gmra.mrb[0].mxu0 %v691
        %v854 = vpop.f32.mrb[0].mxu0
        %v855 = vadd.f32 %v684, %v854
        %v856 = vpop.f32.mrb[0].mxu0
        %857 = vmatprep.mubr.f32.mxu0 0.0
        %858 = vmatmul.mubr.f32.gmra.mrb[0].mxu0 %v694
        %v859 = vpop.f32.mrb[0].mxu0
        %v860 = vadd.f32 %v684, %v859
        %v861 = vpop.f32.mrb[0].mxu0
        %862 = vmatprep.mubr.f32.mxu0 0.0
        %863 = vmatmul.mubr.f32.gmra.mrb[0].mxu0 %v697
        %v864 = vpop.f32.mrb[0].mxu0
        %v865 = vadd.f32 %v684, %v864
        %v866 = vpop.f32.mrb[0].mxu0
        %867 = vmatprep.mubr.f32.mxu0 0.0
        %868 = vmatmul.mubr.f32.gmra.mrb[0].mxu0 %v700
        %v869 = vpop.f32.mrb[0].mxu0
        %v870 = vadd.f32 %v684, %v869
        %v871 = vpop.f32.mrb[0].mxu0
        %872 = vmatprep.mubr.f32.mxu0 0.0
        %873 = vmatmul.mubr.f32.gmra.mrb[0].mxu0 %v703
        %v874 = vpop.f32.mrb[0].mxu0
        %v875 = vadd.f32 %v684, %v874
        %v876 = vpop.f32.mrb[0].mxu0
        %877 = vmatprep.mubr.f32.mxu0 0.0
        %878 = vmatmul.mubr.f32.gmra.mrb[0].mxu0 %v706
        %v879 = vpop.f32.mrb[0].mxu0
        %v880 = vadd.f32 %v684, %v879
        %v881 = vpop.f32.mrb[0].mxu0
        %882 = vmatprep.mubr.f32.mxu0 0.0
        %883 = vmatmul.mubr.f32.gmra.mrb[0].mxu0 %v709
        %v884 = vpop.f32.mrb[0].mxu0
        %v885 = vadd.f32 %v684, %v884
        %v886 = vpop.f32.mrb[0].mxu0
        %887 = vmatprep.mubr.f32.mxu0 0.0
        %888 = vmatmul.mubr.f32.gmra.mrb[0].mxu0 %v712
        %v889 = vpop.f32.mrb[0].mxu0
        %v890 = vadd.f32 %v684, %v889
        %v891 = vpop.f32.mrb[0].mxu0
        %892 = vmatprep.mubr.f32.mxu0 0.0
        %893 = vmatmul.mubr.f32.gmra.mrb[0].mxu0 %v715
        %v894 = vpop.f32.mrb[0].mxu0
        %v895 = vadd.f32 %v684, %v894
        %v896 = vpop.f32.mrb[0].mxu0
        %897 = vmatprep.mubr.f32.mxu0 0.0
        %898 = vmatmul.mubr.f32.gmra.mrb[0].mxu0 %v718
        %v899 = vpop.f32.mrb[0].mxu0
        %v900 = vadd.f32 %v684, %v899
        %v901 = vpop.f32.mrb[0].mxu0
        %902 = vmatprep.mubr.f32.mxu0 0.0
        %903 = vmatmul.mubr.f32.gmra.mrb[0].mxu0 %v721
        %v904 = vpop.f32.mrb[0].mxu0
        %v905 = vadd.f32 %v684, %v904
        %v906 = vpop.f32.mrb[0].mxu0
        %907 = vmatprep.mubr.f32.mxu0 0.0
        %908 = vmatmul.mubr.f32.gmra.mrb[0].mxu0 %v724
        %v909 = vpop.f32.mrb[0].mxu0
        %v910 = vadd.f32 %v684, %v909
        %v911 = vpop.f32.mrb[0].mxu0
        %912 = vmatprep.mubr.f32.mxu0 0.0
        %913 = vmatmul.mubr.f32.gmra.mrb[0].mxu0 %v727
        %v914 = vpop.f32.mrb[0].mxu0
        %v915 = vadd.f32 %v684, %v914
        %v916 = vpop.f32.mrb[0].mxu0
        %917 = vmatprep.mubr.f32.mxu0 0.0
        %918 = vmatmul.mubr.f32.gmra.mrb[0].mxu0 %v730
        %v919 = vpop.f32.mrb[0].mxu0
        %v920 = vadd.f32 %v684, %v919
        %v921 = vpop.f32.mrb[0].mxu0
        %922 = vmatprep.mubr.f32.mxu0 0.0
        %923 = vmatmul.mubr.f32.gmra.mrb[0].mxu0 %v733
        %v924 = vpop.f32.mrb[0].mxu0
        %v925 = vadd.f32 %v684, %v924
        %v926 = vpop.f32.mrb[0].mxu0
        %927 = vmatprep.mubr.f32.mxu0 0.0
        %928 = vmatmul.mubr.f32.gmra.mrb[0].mxu0 %v736
        %v929 = vpop.f32.mrb[0].mxu0
        %v930 = vadd.f32 %v684, %v929
        %v931 = vpop.f32.mrb[0].mxu0
        %932 = vmatprep.mubr.f32.mxu0 0.0
        %933 = vmatmul.mubr.f32.gmra.mrb[0].mxu0 %v739
        %v934 = vpop.f32.mrb[0].mxu0
        %v935 = vadd.f32 %v684, %v934
        %v936 = vpop.f32.mrb[0].mxu0
        %937 = vmatprep.mubr.f32.mxu0 0.0
        %938 = vmatmul.mubr.f32.gmra.mrb[0].mxu0 %v742
        %v939 = vpop.f32.mrb[0].mxu0
        %v940 = vadd.f32 %v684, %v939
        %v941 = vpop.f32.mrb[0].mxu0
        %942 = vmatprep.mubr.f32.mxu0 0.0
        %943 = vmatmul.mubr.f32.gmra.mrb[0].mxu0 %v745
        %v944 = vpop.f32.mrb[0].mxu0
        %v945 = vadd.f32 %v684, %v944
        %v946 = vpop.f32.mrb[0].mxu0
        %947 = vmatprep.mubr.f32.mxu0 0.0
        %948 = vmatmul.mubr.f32.gmra.mrb[0].mxu0 %v748
        %v949 = vpop.f32.mrb[0].mxu0
        %v950 = vadd.f32 %v684, %v949
        %v951 = vpop.f32.mrb[0].mxu0
        %952 = vmatprep.mubr.f32.mxu0 0.0
        %953 = vmatmul.mubr.f32.gmra.mrb[0].mxu0 %v751
        %v954 = vpop.f32.mrb[0].mxu0
        %v955 = vadd.f32 %v684, %v954
        %v956 = vpop.f32.mrb[0].mxu0
        %957 = vmatprep.mubr.f32.mxu0 0.0
        %958 = vmatmul.mubr.f32.gmra.mrb[0].mxu0 %v754
        %v959 = vpop.f32.mrb[0].mxu0
        %v960 = vadd.f32 %v684, %v959
        %v961 = vpop.f32.mrb[0].mxu0
        %962 = vmatprep.mubr.f32.mxu0 0.0
        %963 = vmatmul.mubr.f32.gmra.mrb[0].mxu0 %v757
        %v964 = vpop.f32.mrb[0].mxu0
        %v965 = vadd.f32 %v684, %v964
        %v966 = vpop.f32.mrb[0].mxu0
        %967 = vmatprep.mubr.f32.mxu0 0.0
        %968 = vmatmul.mubr.f32.gmra.mrb[0].mxu0 %v760
        %v969 = vpop.f32.mrb[0].mxu0
        %v970 = vadd.f32 %v684, %v969
        %v971 = vpop.f32.mrb[0].mxu0
        %972 = vmatprep.mubr.f32.mxu0 0.0
        %973 = vmatmul.mubr.f32.gmra.mrb[0].mxu0 %v763
        %v974 = vpop.f32.mrb[0].mxu0
        %v975 = vadd.f32 %v684, %v974
        %v976 = vpop.f32.mrb[0].mxu0
        %977 = vmatprep.mubr.f32.mxu0 0.0
        %978 = vmatmul.mubr.f32.gmra.mrb[0].mxu0 %v766
        %v979 = vpop.f32.mrb[0].mxu0
        %v980 = vadd.f32 %v684, %v979
        %v981 = vpop.f32.mrb[0].mxu0
        %982 = vmatprep.mubr.f32.mxu0 0.0
        %983 = vmatmul.mubr.f32.gmra.mrb[0].mxu0 %v769
        %v984 = vpop.f32.mrb[0].mxu0
        %v985 = vadd.f32 %v684, %v984
        %v986 = vpop.f32.mrb[0].mxu0
        %987 = vmatprep.mubr.f32.mxu0 0.0
        %988 = vmatmul.mubr.f32.gmra.mrb[0].mxu0 %v772
        %v989 = vpop.f32.mrb[0].mxu0
        %v990 = vadd.f32 %v684, %v989
        %v991 = vpop.f32.mrb[0].mxu0
        %992 = vmatprep.mubr.f32.mxu0 0.0
        %993 = vmatmul.mubr.f32.gmra.mrb[0].mxu0 %v775
        %v994 = vpop.f32.mrb[0].mxu0
        %v995 = vadd.f32 %v684, %v994
        %v996 = vpop.f32.mrb[0].mxu0
        %997 = vmatprep.mubr.f32.mxu0 0.0
        %998 = vmatmul.mubr.f32.gmra.mrb[0].mxu0 %v778
        %v999 = vpop.f32.mrb[0].mxu0
        %v1000 = vadd.f32 %v684, %v999
        %v1001 = vpop.f32.mrb[0].mxu0
        %1002 = vmatprep.mubr.f32.mxu0 0.0
        %1003 = vmatmul.mubr.f32.gmra.mrb[0].mxu0 %v781
        %v1004 = vpop.f32.mrb[0].mxu0
        %v1005 = vadd.f32 %v684, %v1004
        %v1006 = vpop.f32.mrb[0].mxu0
        %1007 = vdwg.mxu0
        %v1008 = vmax.f32 %v850, 0.0
        %v1009 = vmax.f32 %v855, 0.0
        %v1010 = vmax.f32 %v860, 0.0
        %v1011 = vmax.f32 %v865, 0.0
        %v1012 = vmax.f32 %v870, 0.0
        %v1013 = vmax.f32 %v875, 0.0
        %v1014 = vmax.f32 %v880, 0.0
        %v1015 = vmax.f32 %v885, 0.0
        %v1016 = vmax.f32 %v890, 0.0
        %v1017 = vmax.f32 %v895, 0.0
        %v1018 = vmax.f32 %v900, 0.0
        %v1019 = vmax.f32 %v905, 0.0
        %v1020 = vmax.f32 %v910, 0.0
        %v1021 = vmax.f32 %v915, 0.0
        %v1022 = vmax.f32 %v920, 0.0
        %v1023 = vmax.f32 %v925, 0.0
        %v1024 = vmax.f32 %v930, 0.0
        %v1025 = vmax.f32 %v935, 0.0
        %v1026 = vmax.f32 %v940, 0.0
        %v1027 = vmax.f32 %v945, 0.0
        %v1028 = vmax.f32 %v950, 0.0
        %v1029 = vmax.f32 %v955, 0.0
        %v1030 = vmax.f32 %v960, 0.0
        %v1031 = vmax.f32 %v965, 0.0
        %v1032 = vmax.f32 %v970, 0.0
        %v1033 = vmax.f32 %v975, 0.0
        %v1034 = vmax.f32 %v980, 0.0
        %v1035 = vmax.f32 %v985, 0.0
        %v1036 = vmax.f32 %v990, 0.0
        %v1037 = vmax.f32 %v995, 0.0
        %v1038 = vmax.f32 %v1000, 0.0
        %v1039 = vmax.f32 %v1005, 0.0
        %v1040 = vld [vmem:[%s5] sm:$0x1]
        %s1041 = sld [smem:[#allocation2]]
        %v1042 = vstv %s1041
        %v1044 = vsel %vm686, %v1040, 0
        %v1047 = vsel %vm686, %v1008, 0
        %v1050 = vsel %vm686, %v1009, 0
        %v1053 = vsel %vm686, %v1010, 0
        %v1056 = vsel %vm686, %v1011, 0
        %v1059 = vsel %vm686, %v1012, 0
        %v1062 = vsel %vm686, %v1013, 0
        %v1065 = vsel %vm686, %v1014, 0
        %v1068 = vsel %vm686, %v1015, 0
        %v1071 = vsel %vm686, %v1016, 0
        %v1074 = vsel %vm686, %v1017, 0
        %v1077 = vsel %vm686, %v1018, 0
        %v1080 = vsel %vm686, %v1019, 0
        %v1083 = vsel %vm686, %v1020, 0
        %v1086 = vsel %vm686, %v1021, 0
        %v1089 = vsel %vm686, %v1022, 0
        %v1092 = vsel %vm686, %v1023, 0
        %v1095 = vsel %vm686, %v1024, 0
        %v1098 = vsel %vm686, %v1025, 0
        %v1101 = vsel %vm686, %v1026, 0
        %v1104 = vsel %vm686, %v1027, 0
        %v1107 = vsel %vm686, %v1028, 0
        %v1110 = vsel %vm686, %v1029, 0
        %v1113 = vsel %vm686, %v1030, 0
        %v1116 = vsel %vm686, %v1031, 0
        %v1119 = vsel %vm686, %v1032, 0
        %v1122 = vsel %vm686, %v1033, 0
        %v1125 = vsel %vm686, %v1034, 0
        %v1128 = vsel %vm686, %v1035, 0
        %v1131 = vsel %vm686, %v1036, 0
        %v1134 = vsel %vm686, %v1037, 0
        %v1137 = vsel %vm686, %v1038, 0
        %v1140 = vsel %vm686, %v1039, 0
        %1142 = vmatprep.subr.mxu0 0.0
        %1143 = vmatpush1.xpose.msra.mxu0 %v1047
        %1144 = vmatprep.subr.mxu0 0.0
        %1145 = vmatpush1.xpose.msra.mxu0 %v1050
        %1146 = vmatprep.subr.mxu0 0.0
        %1147 = vmatpush1.xpose.msra.mxu0 %v1053
        %1148 = vmatprep.subr.mxu0 0.0
        %1149 = vmatpush1.xpose.msra.mxu0 %v1056
        %1150 = vmatprep.subr.mxu0 0.0
        %1151 = vmatpush1.xpose.msra.mxu0 %v1059
        %1152 = vmatprep.subr.mxu0 0.0
        %1153 = vmatpush1.xpose.msra.mxu0 %v1062
        %1154 = vmatprep.subr.mxu0 0.0
        %1155 = vmatpush1.xpose.msra.mxu0 %v1065
        %1156 = vmatprep.subr.mxu0 0.0
        %1157 = vmatpush1.xpose.msra.mxu0 %v1068
        %1158 = vmatprep.subr.mxu0 0.0
        %1159 = vmatpush1.xpose.msra.mxu0 %v1071
        %1160 = vmatprep.subr.mxu0 0.0
        %1161 = vmatpush1.xpose.msra.mxu0 %v1074
        %1162 = vmatprep.subr.mxu0 0.0
        %1163 = vmatpush1.xpose.msra.mxu0 %v1077
        %1164 = vmatprep.subr.mxu0 0.0
        %1165 = vmatpush1.xpose.msra.mxu0 %v1080
        %1166 = vmatprep.subr.mxu0 0.0
        %1167 = vmatpush1.xpose.msra.mxu0 %v1083
        %1168 = vmatprep.subr.mxu0 0.0
        %1169 = vmatpush1.xpose.msra.mxu0 %v1086
        %1170 = vmatprep.subr.mxu0 0.0
        %1171 = vmatpush1.xpose.msra.mxu0 %v1089
        %1172 = vmatprep.subr.mxu0 0.0
        %1173 = vmatpush1.xpose.msra.mxu0 %v1092
        %1174 = vmatprep.subr.mxu0 0.0
        %1175 = vmatpush1.xpose.msra.mxu0 %v1095
        %1176 = vmatprep.subr.mxu0 0.0
        %1177 = vmatpush1.xpose.msra.mxu0 %v1098
        %1178 = vmatprep.subr.mxu0 0.0
        %1179 = vmatpush1.xpose.msra.mxu0 %v1101
        %1180 = vmatprep.subr.mxu0 0.0
        %1181 = vmatpush1.xpose.msra.mxu0 %v1104
        %1182 = vmatprep.subr.mxu0 0.0
        %1183 = vmatpush1.xpose.msra.mxu0 %v1107
        %1184 = vmatprep.subr.mxu0 0.0
        %1185 = vmatpush1.xpose.msra.mxu0 %v1110
        %1186 = vmatprep.subr.mxu0 0.0
        %1187 = vmatpush1.xpose.msra.mxu0 %v1113
        %1188 = vmatprep.subr.mxu0 0.0
        %1189 = vmatpush1.xpose.msra.mxu0 %v1116
        %1190 = vmatprep.subr.mxu0 0.0
        %1191 = vmatpush1.xpose.msra.mxu0 %v1119
        %1192 = vmatprep.subr.mxu0 0.0
        %1193 = vmatpush1.xpose.msra.mxu0 %v1122
        %1194 = vmatprep.subr.mxu0 0.0
        %1195 = vmatpush1.xpose.msra.mxu0 %v1125
        %1196 = vmatprep.subr.mxu0 0.0
        %1197 = vmatpush1.xpose.msra.mxu0 %v1128
        %1198 = vmatprep.subr.mxu0 0.0
        %1199 = vmatpush1.xpose.msra.mxu0 %v1131
        %1200 = vmatprep.subr.mxu0 0.0
        %1201 = vmatpush1.xpose.msra.mxu0 %v1134
        %1202 = vmatprep.subr.mxu0 0.0
        %1203 = vmatpush1.xpose.msra.mxu0 %v1137
        %1204 = vmatprep.subr.mxu0 0.0
        %1205 = vmatpush1.xpose.msra.mxu0 %v1140
        %1206 = vmatprep.mubr.f32.mxu0 0.0
        %1207 = vmatmul.mubr.f32.gmra.mrb[0].mxu0 %v1044
        %v1208 = vpop.f32.mrb[0].mxu0
        %v1209 = vadd.f32 %v1042, %v1208
        %v1210 = vpop.f32.mrb[0].mxu0
        %v1211 = vadd.f32 %v1042, %v1210
        %1212 = vdwg.mxu0
        %v1215 = vcombine.low %v1209, %v1211
        %v1217 = vunpack.c.l.s4 1966171168
        %v1218 = vunpack.c.0.s8 %v1217
        %v1219 = vlaneseq
        %v1220 = vshrl.u32 %v1219, 7
        %v1221 = vsub.s32 %v1218, %v1220
        %v1222 = vrot.slane %v1215, %v1221
        %v1224 = vunpack.c.l.s4 1966171168
        %v1225 = vunpack.c.0.s8 %v1224
        %v1226 = vlaneseq
        %v1227 = vshrl.u32 %v1226, 7
        %v1228 = vsub.s32 %v1225, %v1227
        %v1229 = vrot.slane %v1222, %v1228
        %v1231 = vlaneseq
        %vm1232 = vcmp.ge.s32.totalorder %v1231, 0
        %vm1233 = vcmp.lt.s32.totalorder %v1231, 256
        %vm1234 = vmand %vm1232, %vm1233
        %1235 = vst.msk [vmem:[%s273] sm:$0x3] %vm1234, %v1229
        %s1236 = sand.u32 %s182, 1
        %s1237 = scalar_lea.sflag [#allocation4], %s1236
        %s1238 = sand.u32 %s182, 1
        %s1239 = smul.addr %s1238, 2
        %s1240 = scalar_lea.vmem [#allocation3], %s1239
        // Predicated region
        $region49: #{ppo_critic_forward.1} parent=47 // pred_check
          %p1241 = pneg %p192
        $region50: #{ppo_critic_forward.1} parent=47 // pred_check_branch
          %1243 = sbr.rel (%p1241) target = $region52
        $region51: #{ppo_critic_forward.1} parent=47 // pred_region
          %s1245 = ssub.s32 32, 32
          %1246 = vsyncadd %s1237, %s1245
          %s1247 = smul.addr %s22, 2
          %s1248 = smul.addr %s1247, 16
          %s1249 = scalar_lea.hbm %s7, %s1248
          %s1251 = sshll.u32 %s1240, 4
          %s1252 = int_to_ptr.vmem [resolvable:$true] %s1251
          %1254 = dma.vmem_to_hbm [thread:$0]  %s1252, 32, %s1249, %s1237
        $region52: #{ppo_critic_forward.1} parent=47 // pred_fallthru
          _
      $region48: #{ppo_critic_forward.1} parent=5 // pred_fallthru
        _
      %p1255 = scmp.le.s32.totalorder 2, %s17
      // Predicated region
      $region53: #{ppo_critic_forward.1} parent=5 // pred_check
        %p1256 = pneg %p1255
      $region54: #{ppo_critic_forward.1} parent=5 // pred_check_branch
        %1258 = sbr.rel (%p1256) target = $region56
      $region55: #{ppo_critic_forward.1} parent=5 // pred_region
        %s1259 = ssub.s32 %s17, 2
        // Predicated region
        $region57: #{ppo_critic_forward.1} parent=55 // pred_check
          %p1260 = pneg %p198
        $region58: #{ppo_critic_forward.1} parent=55 // pred_check_branch
          %1262 = sbr.rel (%p1260) target = $region60
        $region59: #{ppo_critic_forward.1} parent=55 // pred_region
          %s1263 = sand.u32 %s183, 1
          %s1264 = scalar_lea.sflag [#allocation4], %s1263
          %s1265 = sand.u32 %s183, 1
          %s1266 = smul.addr %s1265, 2
          %s1267 = scalar_lea.vmem [#allocation3], %s1266
          %1268 = dma.done %s1264, 32
        $region60: #{ppo_critic_forward.1} parent=55 // pred_fallthru
          _
      $region56: #{ppo_critic_forward.1} parent=5 // pred_fallthru
        _
    $region6: #{ppo_critic_forward.1} parent=1 // loop_footer
      %s21 = sadd.s32 1, %s17
    $region7: #{ppo_critic_forward.1} parent=1 // loop_footer_branch
      %16 = sbr.rel target = $region3
    $region8: #{ppo_critic_forward.1} parent=1 // loop_exit
      _
    %1269 = vsyncpa [#allocation4], 1
    %s1270 = scalar_lea.sflag [#allocation4], 1
    %1271 = vsyncpa %s1270, 1

</llo_original>
